<compile_context>
chip_gen: v7x
topology: tpu7x:2x2x1
jax: 0.10.0
libtpu: 0.0.40
codegen_flags: <defaults>
</compile_context>

<pallas_src>
import functools

import jax
import jax.numpy as jnp
from jax.experimental import pallas as pl
from jax.experimental.pallas import tpu as pltpu


def _se_kernel(x_ref, w1_ref, w2_ref, o_ref, *, images, channels, inv_hw):
    # x_ref / o_ref: (images*C, HW) -- C on sublanes, spatial on lanes.
    # w1_ref: (C//r, C) = fc1.weight ; w2_ref: (C, C//r) = fc2.weight.
    x = x_ref[...]                                           # native dtype, no full-tile upcast

    # ---- squeeze: global average pool, f32 accumulation, C stays on sublanes ----
    y = jnp.sum(x, axis=-1, keepdims=True, dtype=jnp.float32) * inv_hw      # (k*C, 1)

    # ---- excitation in column form: (Cr,C)@(C,k) and (C,Cr)@(Cr,k) ----
    w1 = w1_ref[...].astype(jnp.float32)
    w2 = w2_ref[...].astype(jnp.float32)

    if images == 1:
        y_cols = y                                                           # (C, 1)
    else:
        y_cols = jnp.concatenate(
            [y[i * channels:(i + 1) * channels, :] for i in range(images)], axis=1)  # (C, k)

    h = jnp.maximum(jnp.dot(w1, y_cols, preferred_element_type=jnp.float32), 0.0)    # (Cr, k)
    s = jax.nn.sigmoid(jnp.dot(w2, h, preferred_element_type=jnp.float32))           # (C, k)

    if images == 1:
        s_rows = s                                                            # (C, 1)
    else:
        s_rows = jnp.concatenate(
            [s[:, i:i + 1] for i in range(images)], axis=0)                   # (k*C, 1)

    # ---- scale: per-sublane broadcast multiply in x's native dtype, one dense store ----
    o_ref[...] = x * s_rows.astype(x.dtype)


def _choose_images_per_block(B, C, HW, itemsize):
    """Pick how many images to process per grid step (~2 MiB blocks, >=2 steps if B>1)."""
    per_image = max(1, C * HW * itemsize)
    target = 2 * 1024 * 1024
    k = max(1, min(B, target // per_image, 32))
    # Keep at least two grid steps when B > 1 (v7x megacore: 2 TensorCores).
    while k > 1 and (B // k) < 2:
        k -= 1
    # Require an exact blocking of the batch.
    while B % k != 0:
        k -= 1
    return int(k)


@jax.jit
def se_layer(x_nchw, w1, w2):
    """SE forward. x_nchw: (B, C, H, W); w1: (C//r, C) = fc1.weight; w2: (C, C//r) = fc2.weight."""
    B, C, H, W = x_nchw.shape
    Cr = w1.shape[0]
    assert w1.shape == (Cr, C) and w2.shape == (C, Cr)

    itemsize = jnp.dtype(x_nchw.dtype).itemsize
    sublane = {4: 8, 2: 16, 1: 32}[itemsize]
    assert C % sublane == 0, f"C must be a multiple of {sublane} for dtype {x_nchw.dtype}"

    HW = H * W
    x2 = x_nchw.reshape(B * C, HW)          # free reshape: spatial stays contiguous on lanes

    k = _choose_images_per_block(B, C, HW, itemsize)
    block = (k * C, HW)                     # last dim == full array dim -> no pad, no slice
    block_bytes = k * C * HW * itemsize
    w_bytes = (w1.size * jnp.dtype(w1.dtype).itemsize
               + w2.size * jnp.dtype(w2.dtype).itemsize)

    # 2 double-buffered copies of the in block + 2 of the out block + weights + headroom.
    vmem_limit = int(min(96 * 2**20,
                         max(32 * 2**20, 4 * block_bytes + 4 * w_bytes + 4 * 2**20)))
    # TODO(synk): for very large C*H*W per image (v7x: 64 MiB physical VMEM), switch to a
    # two-pass HW-tiled pltpu.emit_pipeline (pass 1 accumulates the pooled sum per channel,
    # pass 2 re-streams x and applies the scale) instead of a whole-image block.
    # TODO(synk): for NHWC-native inputs with HW < 128 and C % 128 == 0, a channels-on-lanes
    # layout gives unmasked lane-dense stores; NCHW inputs would need an extra HBM transpose.

    cost = pl.CostEstimate(
        flops=2 * B * C * HW + 4 * B * C * Cr,       # pool adds + scale muls + two GEMVs
        transcendentals=B * C,                       # sigmoid
        bytes_accessed=2 * B * C * HW * itemsize + w_bytes,
    )

    out = pl.pallas_call(
        functools.partial(_se_kernel, images=k, channels=C, inv_hw=1.0 / HW),
        out_shape=jax.ShapeDtypeStruct((B * C, HW), x2.dtype),
        grid_spec=pltpu.PrefetchScalarGridSpec(
            num_scalar_prefetch=0,
            grid=(B // k,),                                    # k images per step
            in_specs=[
                pl.BlockSpec(block, lambda b: (b, 0)),         # images [b*k, (b+1)*k)
                pl.BlockSpec((Cr, C), lambda b: (0, 0)),       # tiny weights, resident
                pl.BlockSpec((C, Cr), lambda b: (0, 0)),
            ],
            out_specs=pl.BlockSpec(block, lambda b: (b, 0)),
        ),
        compiler_params=pltpu.CompilerParams(
            dimension_semantics=("parallel",),                 # v7x: steps split across 2 TCs
            vmem_limit_bytes=vmem_limit,
        ),
        cost_estimate=cost,
    )(x2, w1, w2)

    return out.reshape(B, C, H, W)


def se_layer_ref(x, w1, w2):
    """Pure-JAX reference mirroring the PyTorch forward (weights in nn.Linear orientation)."""
    y = jnp.mean(x.astype(jnp.float32), axis=(2, 3))           # AdaptiveAvgPool2d(1)
    h = jnp.maximum(y @ w1.astype(jnp.float32).T, 0.0)         # Linear(C, C//r, bias=False) + ReLU
    s = jax.nn.sigmoid(h @ w2.astype(jnp.float32).T)           # Linear(C//r, C, bias=False) + Sigmoid
    return x * s[:, :, None, None].astype(x.dtype)


if __name__ == "__main__":
    key = jax.random.PRNGKey(0)
    kx, k1, k2, kx2 = jax.random.split(key, 4)

    C = 64
    reduction = 16                                   # module default -> hidden = 4
    Cr = C // reduction

    # PyTorch-orientation weights: fc1.weight (C//r, C), fc2.weight (C, C//r), bias=False.
    w1 = jax.random.normal(k1, (Cr, C), dtype=jnp.float32) * 0.1
    w2 = jax.random.normal(k2, (C, Cr), dtype=jnp.float32) * 0.1

    # --- f32, HW a multiple of 128 (16x16) ---
    B, H, W = 2, 16, 16
    x = jax.random.normal(kx, (B, C, H, W), dtype=jnp.float32)
    ref = se_layer_ref(x, w1, w2)
    out = jax.block_until_ready(se_layer(x, w1, w2))
    assert out.shape == (B, C, H, W)
    assert jnp.allclose(out, ref, atol=1e-5, rtol=1e-5), "f32 (16x16) mismatch vs reference"

    # --- f32, ragged spatial (7x7, HW=49) and multi-image blocks (B=4 -> k=2) ---
    B2, H2, W2 = 4, 7, 7
    x_small = jax.random.normal(kx2, (B2, C, H2, W2), dtype=jnp.float32)
    ref_s = se_layer_ref(x_small, w1, w2)
    out_s = jax.block_until_ready(se_layer(x_small, w1, w2))
    assert out_s.shape == (B2, C, H2, W2)
    assert jnp.allclose(out_s, ref_s, atol=1e-5, rtol=1e-5), "f32 (7x7) mismatch vs reference"

    # --- bf16 path (halves HBM bytes on this mem-bound op); pool/FCs still accumulate in f32 ---
    xb, w1b, w2b = (a.astype(jnp.bfloat16) for a in (x, w1, w2))
    ref_b = se_layer_ref(xb, w1b, w2b).astype(jnp.float32)
    out_b = jax.block_until_ready(se_layer(xb, w1b, w2b)).astype(jnp.float32)
    assert out_b.shape == (B, C, H, W)
    assert jnp.allclose(out_b, ref_b, atol=5e-2, rtol=5e-2), "bf16 mismatch vs reference"

    print("KERNEL_OK")
</pallas_src>

<mosaic_0001>
module attributes {stable_mosaic.version = 11 : i64} {
  func.func @_se_kernel(%arg0: i32, %arg1: memref<64x256xf32, #tpu.memory_space<vmem>>, %arg2: memref<4x64xf32, #tpu.memory_space<vmem>>, %arg3: memref<64x4xf32, #tpu.memory_space<vmem>>, %arg4: memref<64x256xf32, #tpu.memory_space<vmem>>) attributes {dimension_semantics = [#tpu.dimension_semantics<parallel>], iteration_bounds = array<i64: 2>, scalar_prefetch = 0 : i64, scratch_operands = 0 : i64, tpu.core_type = #tpu.core_type<tc>, window_params = [{transform_indices = @transform_0, window_bounds = array<i64: 64, 256>}, {pipeline_mode = #tpu.pipeline_mode<synchronous>, transform_indices = @transform_1, window_bounds = array<i64: 4, 64>}, {pipeline_mode = #tpu.pipeline_mode<synchronous>, transform_indices = @transform_2, window_bounds = array<i64: 64, 4>}, {transform_indices = @transform_3, window_bounds = array<i64: 64, 256>}]} {
    %c0 = arith.constant 0 : index
    %c0_0 = arith.constant 0 : index
    %0 = vector.load %arg1[%c0, %c0_0] : memref<64x256xf32, #tpu.memory_space<vmem>>, vector<64x256xf32>
    %cst = arith.constant dense<0.000000e+00> : vector<64xf32>
    %1 = vector.multi_reduction <add>, %0, %cst [1] : vector<64x256xf32> to vector<64xf32>
    %2 = vector.shape_cast %1 : vector<64xf32> to vector<64x1xf32>
    %cst_1 = arith.constant 3.906250e-03 : f32
    %3 = vector.broadcast %cst_1 : f32 to vector<64x1xf32>
    %4 = arith.mulf %2, %3 : vector<64x1xf32>
    %c0_2 = arith.constant 0 : index
    %c0_3 = arith.constant 0 : index
    %5 = vector.load %arg2[%c0_2, %c0_3] : memref<4x64xf32, #tpu.memory_space<vmem>>, vector<4x64xf32>
    %c0_4 = arith.constant 0 : index
    %c0_5 = arith.constant 0 : index
    %6 = vector.load %arg3[%c0_4, %c0_5] : memref<64x4xf32, #tpu.memory_space<vmem>>, vector<64x4xf32>
    %cst_6 = arith.constant dense<0.000000e+00> : vector<4x1xf32>
    %7 = tpu.matmul %5, %4, %cst_6 {dimension_numbers = #tpu.dot_dimension_numbers<[1], [0], [0], [1], [0, 0, 1, 1], [], []>} : vector<4x64xf32>, vector<64x1xf32>, vector<4x1xf32> -> vector<4x1xf32>
    %cst_7 = arith.constant 0.000000e+00 : f32
    %8 = vector.broadcast %cst_7 : f32 to vector<4x1xf32>
    %9 = arith.maximumf %7, %8 : vector<4x1xf32>
    %cst_8 = arith.constant dense<0.000000e+00> : vector<64x1xf32>
    %10 = tpu.matmul %6, %9, %cst_8 {dimension_numbers = #tpu.dot_dimension_numbers<[1], [0], [0], [1], [0, 0, 1, 1], [], []>} : vector<64x4xf32>, vector<4x1xf32>, vector<64x1xf32> -> vector<64x1xf32>
    %11 = arith.negf %10 : vector<64x1xf32>
    %12 = math.exp %11 : vector<64x1xf32>
    %cst_9 = arith.constant 1.000000e+00 : f32
    %13 = vector.broadcast %cst_9 : f32 to vector<64x1xf32>
    %14 = arith.addf %13, %12 : vector<64x1xf32>
    %15 = arith.divf %13, %14 : vector<64x1xf32>
    %16 = vector.broadcast %15 : vector<64x1xf32> to vector<64x256xf32>
    %17 = arith.mulf %0, %16 : vector<64x256xf32>
    %c0_10 = arith.constant 0 : index
    %c0_11 = arith.constant 0 : index
    %18 = vector.load %arg4[%c0_10, %c0_11] : memref<64x256xf32, #tpu.memory_space<vmem>>, vector<64x256xf32>
    tpu.vector_store %arg4[%c0_10, %c0_11], %17 {strides = array<i32>} : memref<64x256xf32, #tpu.memory_space<vmem>>, vector<64x256xf32>,
    return
  }
  func.func @transform_0(%arg0: i32) -> (i32, i32) {
    %c0_i32 = arith.constant 0 : i32
    %c0_i32_0 = arith.constant 0 : i32
    return %arg0, %c0_i32 : i32, i32
  }
  func.func @transform_1(%arg0: i32) -> (i32, i32) {
    %c0_i32 = arith.constant 0 : i32
    %c0_i32_0 = arith.constant 0 : i32
    %c0_i32_1 = arith.constant 0 : i32
    return %c0_i32, %c0_i32_0 : i32, i32
  }
  func.func @transform_2(%arg0: i32) -> (i32, i32) {
    %c0_i32 = arith.constant 0 : i32
    %c0_i32_0 = arith.constant 0 : i32
    %c0_i32_1 = arith.constant 0 : i32
    return %c0_i32, %c0_i32_0 : i32, i32
  }
  func.func @transform_3(%arg0: i32) -> (i32, i32) {
    %c0_i32 = arith.constant 0 : i32
    %c0_i32_0 = arith.constant 0 : i32
    return %arg0, %c0_i32 : i32, i32
  }
}

</mosaic_0001>

<llo_original>
// kernel: se_layer.1
$region0: #{se_layer.1}
  #allocation0 [shape = 'u32[]', space=smem, size = 0x4, offset = 0x4, fixed_abs, tag = 'smem constant byte address 0x4 - core index']
  #allocation1 [shape = 'u32[144,128]{1,0:T(1,128)}', space=vmem, size = 0x12000, scoped, tag = 'internal scratch']
  %s0 = inlined_call_operand.vmem [shape: f32[128,256], index: 0, kind: input, shape index: {}]
  %s1 = inlined_call_operand.vmem [shape: f32[4,64], index: 1, kind: input, shape index: {}]
  %s2 = inlined_call_operand.vmem [shape: f32[64,4], index: 2, kind: input, shape index: {}]
  %s3 = inlined_call_operand.vmem [shape: f32[128,256], index: 3, kind: output, shape index: {}]
  %s4 = sld [smem:[#allocation0]]
  $region45: #{se_layer.1} parent=0
    _
  %s6 = ssub.s32 1, %s4
  %s7 = scalar_select 0, %s6, %s4
  loop: start=0, step=1, limit=4
  $region2: #{se_layer.1} parent=0 // loop_pre_header
    _
  $region3: #{se_layer.1} parent=0 // loop_header
    %s9 = sphi 0, %s13
    %p10 = scmp.ge.s32.totalorder %s9, 4
    %s19 = sphi 0, %s21
    %s22 = sphi 0, %s19
    %s23 = sphi 0, %s22
    %s39 = sphi 0, %s23
    %s43 = sphi 0, %s43
    %s45 = sphi 0, %s43
    %s46 = sphi 0, %s45
    %s60 = sphi 0, %s46
    %s64 = sphi 0, %s64
    %s66 = sphi 0, %s64
    %s67 = sphi 0, %s66
    %s81 = sphi 0, %s67
    %s87 = sphi 0, %s89
    %s90 = sphi 0, %s87
    %s91 = sphi 0, %s90
    %s107 = sphi 0, %s91
  $region4: #{se_layer.1} parent=0 // loop_header_branch
    %12 = sbr.rel (%p10) target = $region8
  $region5: #{se_layer.1} parent=0 // loop_body
    %s14 = ssub.s32 %s9, 1
    %s15 = ssub.s32 %s9, 2
    %s16 = sadd.s32 %s9, 1
    %s17 = ssub.s32 %s9, %s16
    %p18 = scmp.eq.s32.totalorder %s17, 0
    %s20 = sadd.s32 %s19, 1
    %s21 = scalar_select %p18, %s19, %s20
    %p24 = pneg %p18
    %p25 = scmp.eq.s32.totalorder %s9, 1
    %p26 = por %p24, %p25
    %p27 = scmp.ne.s32.totalorder %s19, %s22
    %p28 = scmp.eq.s32.totalorder %s9, 0
    %p29 = por %p27, %p28
    %p30 = scmp.ne.s32.totalorder %s19, %s22
    %p31 = scmp.eq.s32.totalorder %s14, 1
    %p32 = por %p30, %p31
    %p33 = scmp.ne.s32.totalorder %s22, %s23
    %p34 = scmp.eq.s32.totalorder %s14, 0
    %p35 = por %p33, %p34
    %p36 = scmp.ne.s32.totalorder %s22, %s23
    %p37 = scmp.eq.s32.totalorder %s15, 1
    %p38 = por %p36, %p37
    %p40 = scmp.ne.s32.totalorder %s23, %s39
    %p41 = scmp.eq.s32.totalorder %s15, 0
    %p42 = por %p40, %p41
    %s44 = sadd.s32 %s43, 1
    %p47 = scmp.eq.s32.totalorder %s9, 1
    %p48 = scmp.ne.s32.totalorder %s43, %s45
    %p49 = scmp.eq.s32.totalorder %s9, 0
    %p50 = por %p48, %p49
    %p51 = scmp.ne.s32.totalorder %s43, %s45
    %p52 = scmp.eq.s32.totalorder %s14, 1
    %p53 = por %p51, %p52
    %p54 = scmp.ne.s32.totalorder %s45, %s46
    %p55 = scmp.eq.s32.totalorder %s14, 0
    %p56 = por %p54, %p55
    %p57 = scmp.ne.s32.totalorder %s45, %s46
    %p58 = scmp.eq.s32.totalorder %s15, 1
    %p59 = por %p57, %p58
    %p61 = scmp.ne.s32.totalorder %s46, %s60
    %p62 = scmp.eq.s32.totalorder %s15, 0
    %p63 = por %p61, %p62
    %s65 = sadd.s32 %s64, 1
    %p68 = scmp.eq.s32.totalorder %s9, 1
    %p69 = scmp.ne.s32.totalorder %s64, %s66
    %p70 = scmp.eq.s32.totalorder %s9, 0
    %p71 = por %p69, %p70
    %p72 = scmp.ne.s32.totalorder %s64, %s66
    %p73 = scmp.eq.s32.totalorder %s14, 1
    %p74 = por %p72, %p73
    %p75 = scmp.ne.s32.totalorder %s66, %s67
    %p76 = scmp.eq.s32.totalorder %s14, 0
    %p77 = por %p75, %p76
    %p78 = scmp.ne.s32.totalorder %s66, %s67
    %p79 = scmp.eq.s32.totalorder %s15, 1
    %p80 = por %p78, %p79
    %p82 = scmp.ne.s32.totalorder %s67, %s81
    %p83 = scmp.eq.s32.totalorder %s15, 0
    %p84 = por %p82, %p83
    %s85 = ssub.s32 %s9, %s16
    %p86 = scmp.eq.s32.totalorder %s85, 0
    %s88 = sadd.s32 %s87, 1
    %s89 = scalar_select %p86, %s87, %s88
    %p92 = pneg %p86
    %p93 = scmp.eq.s32.totalorder %s9, 1
    %p94 = por %p92, %p93
    %p95 = scmp.ne.s32.totalorder %s87, %s90
    %p96 = scmp.eq.s32.totalorder %s9, 0
    %p97 = por %p95, %p96
    %p98 = scmp.ne.s32.totalorder %s87, %s90
    %p99 = scmp.eq.s32.totalorder %s14, 1
    %p100 = por %p98, %p99
    %p101 = scmp.ne.s32.totalorder %s90, %s91
    %p102 = scmp.eq.s32.totalorder %s14, 0
    %p103 = por %p101, %p102
    %p104 = scmp.ne.s32.totalorder %s90, %s91
    %p105 = scmp.eq.s32.totalorder %s15, 1
    %p106 = por %p104, %p105
    %p108 = scmp.ne.s32.totalorder %s91, %s107
    %p109 = scmp.eq.s32.totalorder %s15, 0
    %p110 = por %p108, %p109
    %p111 = scmp.le.s32.totalorder 1, %s9
    %p112 = scmp.lt.s32.totalorder %s9, 3
    %p113 = pnand %p111, %p112
    %p114 = pneg %p113
    // Predicated region
    $region9: #{se_layer.1} parent=5 // pred_check
      _
    $region10: #{se_layer.1} parent=5 // pred_check_branch
      %116 = sbr.rel (%p113) target = $region12
    $region11: #{se_layer.1} parent=5 // pred_region
      %s117 = ssub.s32 %s9, 1
      // Predicated region
      $region13: #{se_layer.1} parent=11 // pred_check
        %p118 = pneg %p56
      $region14: #{se_layer.1} parent=11 // pred_check_branch
        %120 = sbr.rel (%p118) target = $region16
      $region15: #{se_layer.1} parent=11 // pred_region
        _
      $region16: #{se_layer.1} parent=11 // pred_fallthru
        _
      // Predicated region
      $region17: #{se_layer.1} parent=11 // pred_check
        %p121 = pneg %p77
      $region18: #{se_layer.1} parent=11 // pred_check_branch
        %123 = sbr.rel (%p121) target = $region20
      $region19: #{se_layer.1} parent=11 // pred_region
        _
      $region20: #{se_layer.1} parent=11 // pred_fallthru
        _
    $region12: #{se_layer.1} parent=5 // pred_fallthru
      _
    %p124 = scmp.lt.s32.totalorder %s9, 2
    // Predicated region
    $region21: #{se_layer.1} parent=5 // pred_check
      %p125 = pneg %p124
    $region22: #{se_layer.1} parent=5 // pred_check_branch
      %127 = sbr.rel (%p125) target = $region24
    $region23: #{se_layer.1} parent=5 // pred_region
      // Predicated region
      $region25: #{se_layer.1} parent=23 // pred_check
        %p128 = pneg %p29
      $region26: #{se_layer.1} parent=23 // pred_check_branch
        %130 = sbr.rel (%p128) target = $region28
      $region27: #{se_layer.1} parent=23 // pred_region
        %s131 = smul.u32 8, %s9
        %p132 = scmp.lt.s32.totalorder %s131, 15
        %s133 = scalar_select %p132, %s131, 15
        %s134 = smul.addr %s133, 2
        %s135 = smul.addr %s134, 8
        %s136 = scalar_lea.vmem %s0, %s135
        %s137 = smul.u32 8, %s9
      $region28: #{se_layer.1} parent=23 // pred_fallthru
        _
    $region24: #{se_layer.1} parent=5 // pred_fallthru
      _
    %p138 = scmp.le.s32.totalorder 1, %s9
    %p139 = scmp.lt.s32.totalorder %s9, 3
    %p140 = pnand %p138, %p139
    %p141 = pneg %p140
    // Predicated region
    $region29: #{se_layer.1} parent=5 // pred_check
      _
    $region30: #{se_layer.1} parent=5 // pred_check_branch
      %143 = sbr.rel (%p140) target = $region32
    $region31: #{se_layer.1} parent=5 // pred_region
      %s144 = ssub.s32 %s9, 1
      %s145 = smul.u32 8, %s14
      %p146 = scmp.lt.s32.totalorder %s145, 15
      %s147 = scalar_select %p146, %s145, 15
      %s148 = smul.addr %s147, 2
      %s149 = smul.addr %s148, 8
      %s150 = scalar_lea.vmem %s0, %s149
      %p151 = pneg %p35
      %p152 = pneg %p32
      %p153 = pneg %p56
      %p154 = pneg %p53
      %p155 = pneg %p77
      %p156 = pneg %p74
      %p157 = pneg %p103
      %p158 = pneg %p100
      %s159 = smul.u32 8, %s14
      %p160 = scmp.lt.s32.totalorder %s159, 15
      %s161 = scalar_select %p160, %s159, 15
      %s162 = smul.addr %s161, 2
      %s163 = smul.addr %s162, 8
      %s164 = scalar_lea.vmem %s3, %s163
      %s165 = smul.u32 8, %s14
      %p166 = scmp.lt.s32.totalorder %s165, 15
      %s167 = scalar_select %p166, %s165, 15
      %s168 = smul.addr %s167, 2
      %s169 = smul.addr %s168, 8
      %s170 = scalar_lea.vmem %s0, %s169
      %s171 = smul.u32 8, %s14
      %s172 = smul.u32 8, %s14
      %p173 = scmp.lt.s32.totalorder %s172, 15
      %s174 = scalar_select %p173, %s172, 15
      %s175 = smul.addr %s174, 2
      %s176 = smul.addr %s175, 8
      %s177 = scalar_lea.vmem %s3, %s176
      %s178 = smul.u32 8, %s14
      %v179 = vld [vmem:[%s170] sm:$0xff]
      %v180 = vld [vmem:[%s170 + $0x8] sm:$0xff]
      %v181 = vld [vmem:[%s170 + $0x10] sm:$0xff]
      %v182 = vld [vmem:[%s170 + $0x18] sm:$0xff]
      %v183 = vld [vmem:[%s170 + $0x20] sm:$0xff]
      %v184 = vld [vmem:[%s170 + $0x28] sm:$0xff]
      %v185 = vld [vmem:[%s170 + $0x30] sm:$0xff]
      %v186 = vld [vmem:[%s170 + $0x38] sm:$0xff]
      %v187 = vld [vmem:[%s170 + $0x40] sm:$0xff]
      %v188 = vld [vmem:[%s170 + $0x48] sm:$0xff]
      %v189 = vld [vmem:[%s170 + $0x50] sm:$0xff]
      %v190 = vld [vmem:[%s170 + $0x58] sm:$0xff]
      %v191 = vld [vmem:[%s170 + $0x60] sm:$0xff]
      %v192 = vld [vmem:[%s170 + $0x68] sm:$0xff]
      %v193 = vld [vmem:[%s170 + $0x70] sm:$0xff]
      %v194 = vld [vmem:[%s170 + $0x78] sm:$0xff]
      %v195 = vadd.f32 %v179, %v180
      %196 = vadd.xlane.f32.xlu0 %v195
      %v197 = vpop.xlane.xlu0 %196
      %v198 = vadd.f32 %v181, %v182
      %199 = vadd.xlane.f32.xlu0 %v198
      %v200 = vpop.xlane.xlu0 %199
      %v201 = vadd.f32 %v183, %v184
      %202 = vadd.xlane.f32.xlu0 %v201
      %v203 = vpop.xlane.xlu0 %202
      %v204 = vadd.f32 %v185, %v186
      %205 = vadd.xlane.f32.xlu0 %v204
      %v206 = vpop.xlane.xlu0 %205
      %v207 = vadd.f32 %v187, %v188
      %208 = vadd.xlane.f32.xlu0 %v207
      %v209 = vpop.xlane.xlu0 %208
      %v210 = vadd.f32 %v189, %v190
      %211 = vadd.xlane.f32.xlu0 %v210
      %v212 = vpop.xlane.xlu0 %211
      %v213 = vadd.f32 %v191, %v192
      %214 = vadd.xlane.f32.xlu0 %v213
      %v215 = vpop.xlane.xlu0 %214
      %v216 = vadd.f32 %v193, %v194
      %217 = vadd.xlane.f32.xlu0 %v216
      %v218 = vpop.xlane.xlu0 %217
      %v219 = vmul.f32 %v197, 0.00390625
      %v220 = vmul.f32 %v200, 0.00390625
      %v221 = vmul.f32 %v203, 0.00390625
      %v222 = vmul.f32 %v206, 0.00390625
      %v223 = vmul.f32 %v209, 0.00390625
      %v224 = vmul.f32 %v212, 0.00390625
      %v225 = vmul.f32 %v215, 0.00390625
      %v226 = vmul.f32 %v218, 0.00390625
      %v227 = vld [vmem:[%s1] sm:$0xf]
      %v228 = vld [vmem:[%s2] sm:$0xff]
      %v229 = vld [vmem:[%s2 + $0x8] sm:$0xff]
      %v230 = vld [vmem:[%s2 + $0x10] sm:$0xff]
      %v231 = vld [vmem:[%s2 + $0x18] sm:$0xff]
      %v232 = vld [vmem:[%s2 + $0x20] sm:$0xff]
      %v233 = vld [vmem:[%s2 + $0x28] sm:$0xff]
      %v234 = vld [vmem:[%s2 + $0x30] sm:$0xff]
      %v235 = vld [vmem:[%s2 + $0x38] sm:$0xff]
      %vm236 = vcmask 523264
      %v238 = vsel %vm236, %v227, 0
      %240 = vmatprep.subr.mxu0 0.0
      %241 = vmatpush1.msra.mxu0 %v219
      %242 = vmatprep.subr.mxu0 0.0
      %243 = vmatpush1.msra.mxu0 %v220
      %244 = vmatprep.subr.mxu0 0.0
      %245 = vmatpush1.msra.mxu0 %v221
      %246 = vmatprep.subr.mxu0 0.0
      %247 = vmatpush1.msra.mxu0 %v222
      %248 = vmatprep.subr.mxu0 0.0
      %249 = vmatpush1.msra.mxu0 %v223
      %250 = vmatprep.subr.mxu0 0.0
      %251 = vmatpush1.msra.mxu0 %v224
      %252 = vmatprep.subr.mxu0 0.0
      %253 = vmatpush1.msra.mxu0 %v225
      %254 = vmatprep.subr.mxu0 0.0
      %255 = vmatpush1.msra.mxu0 %v226
      %256 = vmatprep.subr.mxu0 0.0
      %257 = vmatpush1.msra.mxu0 0.0
      %258 = vmatprep.subr.mxu0 0.0
      %259 = vmatpush1.msra.mxu0 0.0
      %260 = vmatprep.subr.mxu0 0.0
      %261 = vmatpush1.msra.mxu0 0.0
      %262 = vmatprep.subr.mxu0 0.0
      %263 = vmatpush1.msra.mxu0 0.0
      %264 = vmatprep.subr.mxu0 0.0
      %265 = vmatpush1.msra.mxu0 0.0
      %266 = vmatprep.subr.mxu0 0.0
      %267 = vmatpush1.msra.mxu0 0.0
      %268 = vmatprep.subr.mxu0 0.0
      %269 = vmatpush1.msra.mxu0 0.0
      %270 = vmatprep.subr.mxu0 0.0
      %271 = vmatpush1.msra.mxu0 0.0
      %272 = vmatprep.subr.mxu0 0.0
      %273 = vmatpush1.msra.mxu0 0.0
      %274 = vmatprep.subr.mxu0 0.0
      %275 = vmatpush1.msra.mxu0 0.0
      %276 = vmatprep.subr.mxu0 0.0
      %277 = vmatpush1.msra.mxu0 0.0
      %278 = vmatprep.subr.mxu0 0.0
      %279 = vmatpush1.msra.mxu0 0.0
      %280 = vmatprep.subr.mxu0 0.0
      %281 = vmatpush1.msra.mxu0 0.0
      %282 = vmatprep.subr.mxu0 0.0
      %283 = vmatpush1.msra.mxu0 0.0
      %284 = vmatprep.subr.mxu0 0.0
      %285 = vmatpush1.msra.mxu0 0.0
      %286 = vmatprep.subr.mxu0 0.0
      %287 = vmatpush1.msra.mxu0 0.0
      %288 = vmatprep.subr.mxu0 0.0
      %289 = vmatpush1.msra.mxu0 0.0
      %290 = vmatprep.subr.mxu0 0.0
      %291 = vmatpush1.msra.mxu0 0.0
      %292 = vmatprep.subr.mxu0 0.0
      %293 = vmatpush1.msra.mxu0 0.0
      %294 = vmatprep.subr.mxu0 0.0
      %295 = vmatpush1.msra.mxu0 0.0
      %296 = vmatprep.subr.mxu0 0.0
      %297 = vmatpush1.msra.mxu0 0.0
      %298 = vmatprep.subr.mxu0 0.0
      %299 = vmatpush1.msra.mxu0 0.0
      %300 = vmatprep.subr.mxu0 0.0
      %301 = vmatpush1.msra.mxu0 0.0
      %302 = vmatprep.subr.mxu0 0.0
      %303 = vmatpush1.msra.mxu0 0.0
      %304 = vmatprep.mubr.f32.mxu0 0.0
      %305 = vmatmul.mubr.f32.gmra.mrb[0].mxu0 %v238
      %v306 = vpop.f32.mrb[0].mxu0
      %v307 = vadd.f32 0.0, %v306
      %v308 = vpop.f32.mrb[0].mxu0
      %309 = vdwg.mxu0
      %v310 = vmax.f32 %v307, 0.0
      %vm311 = vcmask 31744
      %v313 = vsel %vm311, %v228, 0
      %v316 = vsel %vm311, %v229, 0
      %v319 = vsel %vm311, %v230, 0
      %v322 = vsel %vm311, %v231, 0
      %v325 = vsel %vm311, %v232, 0
      %v328 = vsel %vm311, %v233, 0
      %v331 = vsel %vm311, %v234, 0
      %v334 = vsel %vm311, %v235, 0
      %vm336 = vcmask 1043456
      %v338 = vsel %vm336, %v310, 0
      %340 = vmatprep.subr.mxu0 0.0
      %341 = vmatpush1.msra.mxu0 %v338
      %342 = vmatprep.subr.mxu0 0.0
      %343 = vmatpush1.msra.mxu0 0.0
      %344 = vmatprep.subr.mxu0 0.0
      %345 = vmatpush1.msra.mxu0 0.0
      %346 = vmatprep.subr.mxu0 0.0
      %347 = vmatpush1.msra.mxu0 0.0
      %348 = vmatprep.subr.mxu0 0.0
      %349 = vmatpush1.msra.mxu0 0.0
      %350 = vmatprep.subr.mxu0 0.0
      %351 = vmatpush1.msra.mxu0 0.0
      %352 = vmatprep.subr.mxu0 0.0
      %353 = vmatpush1.msra.mxu0 0.0
      %354 = vmatprep.subr.mxu0 0.0
      %355 = vmatpush1.msra.mxu0 0.0
      %356 = vmatprep.subr.mxu0 0.0
      %357 = vmatpush1.msra.mxu0 0.0
      %358 = vmatprep.subr.mxu0 0.0
      %359 = vmatpush1.msra.mxu0 0.0
      %360 = vmatprep.subr.mxu0 0.0
      %361 = vmatpush1.msra.mxu0 0.0
      %362 = vmatprep.subr.mxu0 0.0
      %363 = vmatpush1.msra.mxu0 0.0
      %364 = vmatprep.subr.mxu0 0.0
      %365 = vmatpush1.msra.mxu0 0.0
      %366 = vmatprep.subr.mxu0 0.0
      %367 = vmatpush1.msra.mxu0 0.0
      %368 = vmatprep.subr.mxu0 0.0
      %369 = vmatpush1.msra.mxu0 0.0
      %370 = vmatprep.subr.mxu0 0.0
      %371 = vmatpush1.msra.mxu0 0.0
      %372 = vmatprep.subr.mxu0 0.0
      %373 = vmatpush1.msra.mxu0 0.0
      %374 = vmatprep.subr.mxu0 0.0
      %375 = vmatpush1.msra.mxu0 0.0
      %376 = vmatprep.subr.mxu0 0.0
      %377 = vmatpush1.msra.mxu0 0.0
      %378 = vmatprep.subr.mxu0 0.0
      %379 = vmatpush1.msra.mxu0 0.0
      %380 = vmatprep.subr.mxu0 0.0
      %381 = vmatpush1.msra.mxu0 0.0
      %382 = vmatprep.subr.mxu0 0.0
      %383 = vmatpush1.msra.mxu0 0.0
      %384 = vmatprep.subr.mxu0 0.0
      %385 = vmatpush1.msra.mxu0 0.0
      %386 = vmatprep.subr.mxu0 0.0
      %387 = vmatpush1.msra.mxu0 0.0
      %388 = vmatprep.subr.mxu0 0.0
      %389 = vmatpush1.msra.mxu0 0.0
      %390 = vmatprep.subr.mxu0 0.0
      %391 = vmatpush1.msra.mxu0 0.0
      %392 = vmatprep.subr.mxu0 0.0
      %393 = vmatpush1.msra.mxu0 0.0
      %394 = vmatprep.subr.mxu0 0.0
      %395 = vmatpush1.msra.mxu0 0.0
      %396 = vmatprep.subr.mxu0 0.0
      %397 = vmatpush1.msra.mxu0 0.0
      %398 = vmatprep.subr.mxu0 0.0
      %399 = vmatpush1.msra.mxu0 0.0
      %400 = vmatprep.subr.mxu0 0.0
      %401 = vmatpush1.msra.mxu0 0.0
      %402 = vmatprep.subr.mxu0 0.0
      %403 = vmatpush1.msra.mxu0 0.0
      %404 = vmatprep.mubr.f32.mxu0 0.0
      %405 = vmatmul.mubr.f32.gmra.mrb[0].mxu0 %v313
      %v406 = vpop.f32.mrb[0].mxu0
      %v407 = vadd.f32 0.0, %v406
      %v408 = vpop.f32.mrb[0].mxu0
      %409 = vmatprep.mubr.f32.mxu0 0.0
      %410 = vmatmul.mubr.f32.gmra.mrb[0].mxu0 %v316
      %v411 = vpop.f32.mrb[0].mxu0
      %v412 = vadd.f32 0.0, %v411
      %v413 = vpop.f32.mrb[0].mxu0
      %414 = vmatprep.mubr.f32.mxu0 0.0
      %415 = vmatmul.mubr.f32.gmra.mrb[0].mxu0 %v319
      %v416 = vpop.f32.mrb[0].mxu0
      %v417 = vadd.f32 0.0, %v416
      %v418 = vpop.f32.mrb[0].mxu0
      %419 = vmatprep.mubr.f32.mxu0 0.0
      %420 = vmatmul.mubr.f32.gmra.mrb[0].mxu0 %v322
      %v421 = vpop.f32.mrb[0].mxu0
      %v422 = vadd.f32 0.0, %v421
      %v423 = vpop.f32.mrb[0].mxu0
      %424 = vmatprep.mubr.f32.mxu0 0.0
      %425 = vmatmul.mubr.f32.gmra.mrb[0].mxu0 %v325
      %v426 = vpop.f32.mrb[0].mxu0
      %v427 = vadd.f32 0.0, %v426
      %v428 = vpop.f32.mrb[0].mxu0
      %429 = vmatprep.mubr.f32.mxu0 0.0
      %430 = vmatmul.mubr.f32.gmra.mrb[0].mxu0 %v328
      %v431 = vpop.f32.mrb[0].mxu0
      %v432 = vadd.f32 0.0, %v431
      %v433 = vpop.f32.mrb[0].mxu0
      %434 = vmatprep.mubr.f32.mxu0 0.0
      %435 = vmatmul.mubr.f32.gmra.mrb[0].mxu0 %v331
      %v436 = vpop.f32.mrb[0].mxu0
      %v437 = vadd.f32 0.0, %v436
      %v438 = vpop.f32.mrb[0].mxu0
      %439 = vmatprep.mubr.f32.mxu0 0.0
      %440 = vmatmul.mubr.f32.gmra.mrb[0].mxu0 %v334
      %v441 = vpop.f32.mrb[0].mxu0
      %v442 = vadd.f32 0.0, %v441
      %v443 = vpop.f32.mrb[0].mxu0
      %444 = vdwg.mxu0
      %v445 = vxor.u32 %v407, 2147483648
      %v446 = vxor.u32 %v412, 2147483648
      %v447 = vxor.u32 %v417, 2147483648
      %v448 = vxor.u32 %v422, 2147483648
      %v449 = vxor.u32 %v427, 2147483648
      %v450 = vxor.u32 %v432, 2147483648
      %v451 = vxor.u32 %v437, 2147483648
      %v452 = vxor.u32 %v442, 2147483648
      %v453 = vmul.f32 %v445, 1.442695
      %v454 = vpow.pop %v453
      %v455 = vmul.f32 %v446, 1.442695
      %v456 = vpow.pop %v455
      %v457 = vmul.f32 %v447, 1.442695
      %v458 = vpow.pop %v457
      %v459 = vmul.f32 %v448, 1.442695
      %v460 = vpow.pop %v459
      %v461 = vmul.f32 %v449, 1.442695
      %v462 = vpow.pop %v461
      %v463 = vmul.f32 %v450, 1.442695
      %v464 = vpow.pop %v463
      %v465 = vmul.f32 %v451, 1.442695
      %v466 = vpow.pop %v465
      %v467 = vmul.f32 %v452, 1.442695
      %v468 = vpow.pop %v467
      %v469 = vadd.f32 %v454, 1.0
      %v470 = vadd.f32 %v456, 1.0
      %v471 = vadd.f32 %v458, 1.0
      %v472 = vadd.f32 %v460, 1.0
      %v473 = vadd.f32 %v462, 1.0
      %v474 = vadd.f32 %v464, 1.0
      %v475 = vadd.f32 %v466, 1.0
      %v476 = vadd.f32 %v468, 1.0
      %v477 = vrcp.pop %v469
      %v478 = vmul.f32 1.0, %v477
      %v479 = vrcp.pop %v470
      %v480 = vmul.f32 1.0, %v479
      %v481 = vrcp.pop %v471
      %v482 = vmul.f32 1.0, %v481
      %v483 = vrcp.pop %v472
      %v484 = vmul.f32 1.0, %v483
      %v485 = vrcp.pop %v473
      %v486 = vmul.f32 1.0, %v485
      %v487 = vrcp.pop %v474
      %v488 = vmul.f32 1.0, %v487
      %v489 = vrcp.pop %v475
      %v490 = vmul.f32 1.0, %v489
      %v491 = vrcp.pop %v476
      %v492 = vmul.f32 1.0, %v491
      %494 = vset.pattern.permute.xlu0 0
      %495 = vperm.xlu0 %494, %v478
      %v496 = vpop.permute.xlu0 %495
      %499 = vset.pattern.permute.xlu0 0
      %500 = vperm.xlu0 %499, %v480
      %v501 = vpop.permute.xlu0 %500
      %504 = vset.pattern.permute.xlu0 0
      %505 = vperm.xlu0 %504, %v482
      %v506 = vpop.permute.xlu0 %505
      %509 = vset.pattern.permute.xlu0 0
      %510 = vperm.xlu0 %509, %v484
      %v511 = vpop.permute.xlu0 %510
      %514 = vset.pattern.permute.xlu0 0
      %515 = vperm.xlu0 %514, %v486
      %v516 = vpop.permute.xlu0 %515
      %519 = vset.pattern.permute.xlu0 0
      %520 = vperm.xlu0 %519, %v488
      %v521 = vpop.permute.xlu0 %520
      %524 = vset.pattern.permute.xlu0 0
      %525 = vperm.xlu0 %524, %v490
      %v526 = vpop.permute.xlu0 %525
      %529 = vset.pattern.permute.xlu0 0
      %530 = vperm.xlu0 %529, %v492
      %v531 = vpop.permute.xlu0 %530
      %v533 = vmul.f32 %v179, %v496
      %v534 = vmul.f32 %v180, %v496
      %v535 = vmul.f32 %v181, %v501
      %v536 = vmul.f32 %v182, %v501
      %v537 = vmul.f32 %v183, %v506
      %v538 = vmul.f32 %v184, %v506
      %v539 = vmul.f32 %v185, %v511
      %v540 = vmul.f32 %v186, %v511
      %v541 = vmul.f32 %v187, %v516
      %v542 = vmul.f32 %v188, %v516
      %v543 = vmul.f32 %v189, %v521
      %v544 = vmul.f32 %v190, %v521
      %v545 = vmul.f32 %v191, %v526
      %v546 = vmul.f32 %v192, %v526
      %v547 = vmul.f32 %v193, %v531
      %v548 = vmul.f32 %v194, %v531
      %549 = vst [vmem:[%s177] sm:$0xff] %v533
      %550 = vst [vmem:[%s177 + $0x8] sm:$0xff] %v534
      %551 = vst [vmem:[%s177 + $0x10] sm:$0xff] %v535
      %552 = vst [vmem:[%s177 + $0x18] sm:$0xff] %v536
      %553 = vst [vmem:[%s177 + $0x20] sm:$0xff] %v537
      %554 = vst [vmem:[%s177 + $0x28] sm:$0xff] %v538
      %555 = vst [vmem:[%s177 + $0x30] sm:$0xff] %v539
      %556 = vst [vmem:[%s177 + $0x38] sm:$0xff] %v540
      %557 = vst [vmem:[%s177 + $0x40] sm:$0xff] %v541
      %558 = vst [vmem:[%s177 + $0x48] sm:$0xff] %v542
      %559 = vst [vmem:[%s177 + $0x50] sm:$0xff] %v543
      %560 = vst [vmem:[%s177 + $0x58] sm:$0xff] %v544
      %561 = vst [vmem:[%s177 + $0x60] sm:$0xff] %v545
      %562 = vst [vmem:[%s177 + $0x68] sm:$0xff] %v546
      %563 = vst [vmem:[%s177 + $0x70] sm:$0xff] %v547
      %564 = vst [vmem:[%s177 + $0x78] sm:$0xff] %v548
      %s565 = smul.u32 8, %s14
      %p566 = scmp.lt.s32.totalorder %s565, 15
      %s567 = scalar_select %p566, %s565, 15
      %s568 = smul.addr %s567, 2
      %s569 = smul.addr %s568, 8
      %s570 = scalar_lea.vmem %s3, %s569
      // Predicated region
      $region33: #{se_layer.1} parent=31 // pred_check
        %p571 = pneg %p100
      $region34: #{se_layer.1} parent=31 // pred_check_branch
        %573 = sbr.rel (%p571) target = $region36
      $region35: #{se_layer.1} parent=31 // pred_region
        %s574 = smul.u32 8, %s14
      $region36: #{se_layer.1} parent=31 // pred_fallthru
        _
    $region32: #{se_layer.1} parent=5 // pred_fallthru
      _
    %p575 = scmp.le.s32.totalorder 2, %s9
    // Predicated region
    $region37: #{se_layer.1} parent=5 // pred_check
      %p576 = pneg %p575
    $region38: #{se_layer.1} parent=5 // pred_check_branch
      %578 = sbr.rel (%p576) target = $region40
    $region39: #{se_layer.1} parent=5 // pred_region
      %s579 = ssub.s32 %s9, 2
      // Predicated region
      $region41: #{se_layer.1} parent=39 // pred_check
        %p580 = pneg %p106
      $region42: #{se_layer.1} parent=39 // pred_check_branch
        %582 = sbr.rel (%p580) target = $region44
      $region43: #{se_layer.1} parent=39 // pred_region
        %s583 = smul.u32 8, %s15
        %p584 = scmp.lt.s32.totalorder %s583, 15
        %s585 = scalar_select %p584, %s583, 15
        %s586 = smul.addr %s585, 2
        %s587 = smul.addr %s586, 8
        %s588 = scalar_lea.vmem %s3, %s587
      $region44: #{se_layer.1} parent=39 // pred_fallthru
        _
    $region40: #{se_layer.1} parent=5 // pred_fallthru
      _
  $region6: #{se_layer.1} parent=0 // loop_footer
    %s13 = sadd.s32 1, %s9
  $region7: #{se_layer.1} parent=0 // loop_footer_branch
    %8 = sbr.rel target = $region3
  $region8: #{se_layer.1} parent=0 // loop_exit
    _

</llo_original>
